<compile_context>
chip_gen: v5e
topology: v5e:2x2
jax: 0.10.0
libtpu: 0.0.40
codegen_flags: <defaults>
</compile_context>

<pallas_src>
import jax
import jax.numpy as jnp
from jax.experimental import pallas as pl
from jax.experimental.pallas import tpu as pltpu


def _round_up(x: int, m: int) -> int:
    return ((x + m - 1) // m) * m


def fcn_kernel(x_ref, w1_ref, b1_ref, w2_ref, b2_ref, o_ref):
    # Layer 1: X @ W1 + b1  (MXU, f32 accumulation; bias broadcast over the batch tile).
    y1 = jnp.dot(x_ref[...], w1_ref[...],
                 preferred_element_type=jnp.float32) + b1_ref[...]

    # Sigmoid via the tanh identity: a single EUP push per vreg (vs exp + reciprocal).
    y2 = 0.5 * (1.0 + jnp.tanh(0.5 * y1))

    # Layer 2: cast the activation to the MXU operand dtype only for the matmul;
    # accumulation and everything downstream stays f32.  Output width is the real O
    # (no lane padding) so the HBM writeback is minimal.
    y3 = jnp.dot(y2.astype(w2_ref.dtype), w2_ref[...],
                 preferred_element_type=jnp.float32) + b2_ref[...]

    # Softmax over the (narrow) logit axis.  Max-subtraction is mathematically identical
    # to exp/sum(exp) wherever that is finite, and overflow-safe otherwise.  Exact VPU
    # divide so each row sums to 1.
    m = jnp.max(y3, axis=-1, keepdims=True)
    e = jnp.exp(y3 - m)
    o_ref[...] = e / jnp.sum(e, axis=-1, keepdims=True)


def _choose_tile(B: int, sublane: int, tile_b: int) -> int:
    """Pick a batch tile: big (amortize per-step overhead), sublane-aligned, and — when
    the batch allows — small enough to give >=2 grid steps for v7x megacore sharding."""
    b_sub = _round_up(B, sublane)
    tile = _round_up(min(int(tile_b), b_sub), sublane)
    if tile >= b_sub and b_sub >= 2 * sublane:
        tile = _round_up((b_sub + 1) // 2, sublane)
    return tile


def fcn_forward(x, w1, b1, w2, b2, *, tile_b=8192, mxu_dtype=jnp.bfloat16):
    """Forward pass of the FCN module.  Returns softmax probabilities, shape (B, O).

    mxu_dtype=bf16 (default) feeds the MXU at its packed rate on all generations;
    pass jnp.float32 for near-exact parity with the f32 PyTorch module.
    Wrap calls in jax.jit so the padding / final slice fuse with the kernel launch.
    """
    B, D_in = x.shape
    H = w1.shape[1]
    O = w2.shape[1]

    mxu_dtype = jnp.dtype(mxu_dtype)
    sublane = 16 if mxu_dtype == jnp.dtype(jnp.bfloat16) else 8

    tile = _choose_tile(B, sublane, tile_b)
    B_PAD = _round_up(B, tile)

    # Hidden dim padded to a full lane width so the layer-2 K dim and the whole
    # elementwise/EUP chain are lane-dense.  Weights are resident (read once), so this
    # adds no per-tile HBM traffic.  Padded hidden lanes see w2 rows == 0, so their
    # sigmoid(0)=0.5 contribution vanishes.
    H_PAD = _round_up(H, 128)

    # X: skip the pad/cast copy when it is a no-op.
    if B_PAD == B and x.dtype == mxu_dtype:
        x_p = x
    else:
        x_p = jnp.zeros((B_PAD, D_in), mxu_dtype).at[:B, :].set(x.astype(mxu_dtype))

    w1_p = jnp.zeros((D_in, H_PAD), mxu_dtype).at[:, :H].set(w1.astype(mxu_dtype))
    b1_p = jnp.zeros((1, H_PAD), jnp.float32).at[:, :H].set(
        b1.reshape(1, H).astype(jnp.float32))
    w2_p = jnp.zeros((H_PAD, O), mxu_dtype).at[:H, :].set(w2.astype(mxu_dtype))
    b2_p = b2.reshape(1, O).astype(jnp.float32)

    grid = (B_PAD // tile,)

    # Advisory cost hint for XLA's scheduler.
    elt = mxu_dtype.itemsize
    flops = 2 * B_PAD * (D_in * H_PAD + H_PAD * O)
    transcendentals = B_PAD * (H_PAD + O)  # tanh per hidden elem + exp per logit
    bytes_accessed = ((x_p.size + w1_p.size + w2_p.size) * elt
                      + (b1_p.size + b2_p.size + B_PAD * O) * 4)

    out = pl.pallas_call(
        fcn_kernel,
        out_shape=jax.ShapeDtypeStruct((B_PAD, O), jnp.float32),
        grid=grid,
        in_specs=[
            pl.BlockSpec((tile, D_in), lambda i: (i, 0)),    # X: pipelined per batch tile
            pl.BlockSpec((D_in, H_PAD), lambda i: (0, 0)),   # W1: VMEM-resident
            pl.BlockSpec((1, H_PAD), lambda i: (0, 0)),      # b1: resident
            pl.BlockSpec((H_PAD, O), lambda i: (0, 0)),      # W2: resident
            pl.BlockSpec((1, O), lambda i: (0, 0)),          # b2: resident
        ],
        # O-wide output block (last dim == full array dim): 16x less writeback than a
        # 128-lane padded output for O=8; masked vst in VMEM is cheaper than the DMA bytes.
        out_specs=pl.BlockSpec((tile, O), lambda i: (i, 0)),
        compiler_params=pltpu.CompilerParams(
            dimension_semantics=("parallel",)),
        cost_estimate=pl.CostEstimate(
            flops=flops,
            transcendentals=transcendentals,
            bytes_accessed=bytes_accessed),
    )(x_p, w1_p, b1_p, w2_p, b2_p)

    return out if B_PAD == B else out[:B, :]


def _reference(x, w1, b1, w2, b2, operand_dtype=jnp.float32):
    """Plain-JAX reference with the exact math of the PyTorch forward().  operand_dtype
    optionally mimics the kernel's MXU operand cast (bf16 operands, f32 accumulate)."""
    f32 = jnp.float32
    cast = lambda a: a.astype(operand_dtype).astype(f32)
    y1 = cast(x) @ cast(w1) + b1
    y2 = 1.0 / (1.0 + jnp.exp(-y1))
    y3 = cast(y2) @ cast(w2) + b2
    e = jnp.exp(y3)
    return e / jnp.sum(e, axis=1, keepdims=True)


if __name__ == "__main__":
    # Small shapes consistent with the module: hidden_dim is fixed at 32 in __init__.
    batch, input_dim, hidden_dim, output_dim = 8, 16, 32, 8

    key = jax.random.PRNGKey(0)
    kx, kw1, kb1, kw2, kb2, kx2, kx3 = jax.random.split(key, 7)

    x = jax.random.normal(kx, (batch, input_dim), dtype=jnp.float32)
    w1 = jax.random.normal(kw1, (input_dim, hidden_dim), dtype=jnp.float32)
    b1 = jax.random.normal(kb1, (hidden_dim,), dtype=jnp.float32)
    w2 = jax.random.normal(kw2, (hidden_dim, output_dim), dtype=jnp.float32)
    b2 = jax.random.normal(kb2, (output_dim,), dtype=jnp.float32)

    fwd = jax.jit(fcn_forward, static_argnames=("tile_b", "mxu_dtype"))

    # 1) f32 MXU operands: near-exact parity with the PyTorch forward().
    y_f32 = fwd(x, w1, b1, w2, b2, mxu_dtype=jnp.float32)
    jax.block_until_ready(y_f32)
    y_ref = _reference(x, w1, b1, w2, b2)
    assert y_f32.shape == (batch, output_dim)
    assert jnp.allclose(y_f32, y_ref, atol=1e-3, rtol=1e-3), "mismatch (f32 path)"

    # 2) Default bf16 MXU operands (documented precision deviation; f32 accumulate).
    y_bf = fwd(x, w1, b1, w2, b2)
    jax.block_until_ready(y_bf)
    y_ref_bf = _reference(x, w1, b1, w2, b2, operand_dtype=jnp.bfloat16)
    assert y_bf.shape == (batch, output_dim)
    assert jnp.allclose(y_bf, y_ref_bf, atol=1e-2, rtol=1e-2), "mismatch (bf16 path)"

    # 3) Multi-step grid + non-multiple batch (exercises padding & pipelining).
    batch2 = 40
    x2 = jax.random.normal(kx2, (batch2, input_dim), dtype=jnp.float32)
    y2 = fwd(x2, w1, b1, w2, b2, tile_b=16)
    jax.block_until_ready(y2)
    y2_ref = _reference(x2, w1, b1, w2, b2, operand_dtype=jnp.bfloat16)
    assert y2.shape == (batch2, output_dim)
    assert jnp.allclose(y2, y2_ref, atol=1e-2, rtol=1e-2), "mismatch (tiled)"

    # 4) Larger batch with the default auto-tile (>=2 grid steps -> v7x megacore).
    batch3 = 1000
    x3 = jax.random.normal(kx3, (batch3, input_dim), dtype=jnp.float32)
    y3 = fwd(x3, w1, b1, w2, b2)
    jax.block_until_ready(y3)
    y3_ref = _reference(x3, w1, b1, w2, b2, operand_dtype=jnp.bfloat16)
    assert y3.shape == (batch3, output_dim)
    assert jnp.allclose(y3, y3_ref, atol=1e-2, rtol=1e-2), "mismatch (large batch)"

    print("KERNEL_OK")
</pallas_src>

<mosaic_0001>
module attributes {stable_mosaic.version = 11 : i64} {
  func.func @fcn_kernel(%arg0: i32, %arg1: memref<8x16xf32, #tpu.memory_space<vmem>>, %arg2: memref<16x128xf32, #tpu.memory_space<vmem>>, %arg3: memref<1x128xf32, #tpu.memory_space<vmem>>, %arg4: memref<128x8xf32, #tpu.memory_space<vmem>>, %arg5: memref<1x8xf32, #tpu.memory_space<vmem>>, %arg6: memref<8x8xf32, #tpu.memory_space<vmem>>) attributes {dimension_semantics = [#tpu.dimension_semantics<parallel>], iteration_bounds = array<i64: 1>, scalar_prefetch = 0 : i64, scratch_operands = 0 : i64, tpu.core_type = #tpu.core_type<tc>, window_params = [{transform_indices = @transform_0, window_bounds = array<i64: 8, 16>}, {pipeline_mode = #tpu.pipeline_mode<synchronous>, transform_indices = @transform_1, window_bounds = array<i64: 16, 128>}, {pipeline_mode = #tpu.pipeline_mode<synchronous>, transform_indices = @transform_2, window_bounds = array<i64: 1, 128>}, {pipeline_mode = #tpu.pipeline_mode<synchronous>, transform_indices = @transform_3, window_bounds = array<i64: 128, 8>}, {pipeline_mode = #tpu.pipeline_mode<synchronous>, transform_indices = @transform_4, window_bounds = array<i64: 1, 8>}, {transform_indices = @transform_5, window_bounds = array<i64: 8, 8>}]} {
    %c0 = arith.constant 0 : index
    %c0_0 = arith.constant 0 : index
    %0 = vector.load %arg1[%c0, %c0_0] : memref<8x16xf32, #tpu.memory_space<vmem>>, vector<8x16xf32>
    %c0_1 = arith.constant 0 : index
    %c0_2 = arith.constant 0 : index
    %1 = vector.load %arg2[%c0_1, %c0_2] : memref<16x128xf32, #tpu.memory_space<vmem>>, vector<16x128xf32>
    %cst = arith.constant dense<0.000000e+00> : vector<8x128xf32>
    %2 = tpu.matmul %0, %1, %cst {dimension_numbers = #tpu.dot_dimension_numbers<[1], [0], [0], [1], [0, 0, 1, 1], [], []>} : vector<8x16xf32>, vector<16x128xf32>, vector<8x128xf32> -> vector<8x128xf32>
    %c0_3 = arith.constant 0 : index
    %c0_4 = arith.constant 0 : index
    %3 = vector.load %arg3[%c0_3, %c0_4] : memref<1x128xf32, #tpu.memory_space<vmem>>, vector<1x128xf32>
    %4 = vector.broadcast %3 : vector<1x128xf32> to vector<8x128xf32>
    %5 = arith.addf %2, %4 : vector<8x128xf32>
    %cst_5 = arith.constant 5.000000e-01 : f32
    %6 = vector.broadcast %cst_5 : f32 to vector<8x128xf32>
    %7 = arith.mulf %6, %5 : vector<8x128xf32>
    %8 = math.tanh %7 : vector<8x128xf32>
    %cst_6 = arith.constant 1.000000e+00 : f32
    %9 = vector.broadcast %cst_6 : f32 to vector<8x128xf32>
    %10 = arith.addf %9, %8 : vector<8x128xf32>
    %cst_7 = arith.constant 5.000000e-01 : f32
    %11 = vector.broadcast %cst_7 : f32 to vector<8x128xf32>
    %12 = arith.mulf %11, %10 : vector<8x128xf32>
    %c0_8 = arith.constant 0 : index
    %c0_9 = arith.constant 0 : index
    %13 = vector.load %arg4[%c0_8, %c0_9] : memref<128x8xf32, #tpu.memory_space<vmem>>, vector<128x8xf32>
    %cst_10 = arith.constant dense<0.000000e+00> : vector<8x8xf32>
    %14 = tpu.matmul %12, %13, %cst_10 {dimension_numbers = #tpu.dot_dimension_numbers<[1], [0], [0], [1], [0, 0, 1, 1], [], []>} : vector<8x128xf32>, vector<128x8xf32>, vector<8x8xf32> -> vector<8x8xf32>
    %c0_11 = arith.constant 0 : index
    %c0_12 = arith.constant 0 : index
    %15 = vector.load %arg5[%c0_11, %c0_12] : memref<1x8xf32, #tpu.memory_space<vmem>>, vector<1x8xf32>
    %16 = vector.broadcast %15 : vector<1x8xf32> to vector<8x8xf32>
    %17 = arith.addf %14, %16 : vector<8x8xf32>
    %cst_13 = arith.constant dense<0xFF800000> : vector<8xf32>
    %18 = vector.multi_reduction <maximumf>, %17, %cst_13 [1] : vector<8x8xf32> to vector<8xf32>
    %19 = vector.shape_cast %18 : vector<8xf32> to vector<8x1xf32>
    %20 = vector.broadcast %19 : vector<8x1xf32> to vector<8x8xf32>
    %21 = arith.subf %17, %20 : vector<8x8xf32>
    %22 = math.exp %21 : vector<8x8xf32>
    %cst_14 = arith.constant dense<0.000000e+00> : vector<8xf32>
    %23 = vector.multi_reduction <add>, %22, %cst_14 [1] : vector<8x8xf32> to vector<8xf32>
    %24 = vector.shape_cast %23 : vector<8xf32> to vector<8x1xf32>
    %25 = vector.broadcast %24 : vector<8x1xf32> to vector<8x8xf32>
    %26 = arith.divf %22, %25 : vector<8x8xf32>
    %c0_15 = arith.constant 0 : index
    %c0_16 = arith.constant 0 : index
    %27 = vector.load %arg6[%c0_15, %c0_16] : memref<8x8xf32, #tpu.memory_space<vmem>>, vector<8x8xf32>
    tpu.vector_store %arg6[%c0_15, %c0_16], %26 {strides = array<i32>} : memref<8x8xf32, #tpu.memory_space<vmem>>, vector<8x8xf32>,
    return
  }
  func.func @transform_0(%arg0: i32) -> (i32, i32) {
    %c0_i32 = arith.constant 0 : i32
    %c0_i32_0 = arith.constant 0 : i32
    return %arg0, %c0_i32 : i32, i32
  }
  func.func @transform_1(%arg0: i32) -> (i32, i32) {
    %c0_i32 = arith.constant 0 : i32
    %c0_i32_0 = arith.constant 0 : i32
    %c0_i32_1 = arith.constant 0 : i32
    return %c0_i32, %c0_i32_0 : i32, i32
  }
  func.func @transform_2(%arg0: i32) -> (i32, i32) {
    %c0_i32 = arith.constant 0 : i32
    %c0_i32_0 = arith.constant 0 : i32
    %c0_i32_1 = arith.constant 0 : i32
    return %c0_i32, %c0_i32_0 : i32, i32
  }
  func.func @transform_3(%arg0: i32) -> (i32, i32) {
    %c0_i32 = arith.constant 0 : i32
    %c0_i32_0 = arith.constant 0 : i32
    %c0_i32_1 = arith.constant 0 : i32
    return %c0_i32, %c0_i32_0 : i32, i32
  }
  func.func @transform_4(%arg0: i32) -> (i32, i32) {
    %c0_i32 = arith.constant 0 : i32
    %c0_i32_0 = arith.constant 0 : i32
    %c0_i32_1 = arith.constant 0 : i32
    return %c0_i32, %c0_i32_0 : i32, i32
  }
  func.func @transform_5(%arg0: i32) -> (i32, i32) {
    %c0_i32 = arith.constant 0 : i32
    %c0_i32_0 = arith.constant 0 : i32
    return %arg0, %c0_i32 : i32, i32
  }
}

</mosaic_0001>

<llo_original>
// kernel: fcn_forward.1
$region0: #{fcn_forward.1}
  #allocation0 [shape = 'u32[]', space=smem, size = 0x4, offset = 0x4, fixed_abs, tag = 'smem constant byte address 0x4 - core index']
  #allocation1 [shape = 'u32[72,128]{1,0:T(1,128)}', space=vmem, size = 0x9000, scoped, tag = 'internal scratch']
  %s0 = inlined_call_operand.vmem [shape: f32[8,16], index: 0, kind: input, shape index: {}]
  %s1 = inlined_call_operand.vmem [shape: f32[16,128], index: 1, kind: input, shape index: {}]
  %s2 = inlined_call_operand.vmem [shape: f32[1,128], index: 2, kind: input, shape index: {}]
  %s3 = inlined_call_operand.vmem [shape: f32[128,8], index: 3, kind: input, shape index: {}]
  %s4 = inlined_call_operand.vmem [shape: f32[1,8], index: 4, kind: input, shape index: {}]
  %s5 = inlined_call_operand.hbm [shape: f32[8,8], index: 5, kind: output, shape index: {}]
  %s6 = sld [smem:[#allocation0]]
  $region30: #{fcn_forward.1} parent=0
    _
  %s8 = ssub.s32 1, %s6
  %s9 = scalar_select 0, %s8, %s6
  $region1: #{fcn_forward.1} parent=0
    #allocation2 [shape = 'u8[4096]{0}', space=vmem, size = 0x1000, scoped, tag = 'output window, operand 0, single buffered']
    #allocation3 [shape = 's32[1]{0}', space=sflag, size = 0x4, scoped, tag = 'scoped memory for fcn_forward.1']
    %10 = vsyncpa [#allocation3], 0
    // Predicated region
    $region2: #{fcn_forward.1} parent=1 // pred_check
      _
    $region3: #{fcn_forward.1} parent=1 // pred_check_branch
      %12 = sbr.rel (0) target = $region5
    $region4: #{fcn_forward.1} parent=1 // pred_region
      _
    $region5: #{fcn_forward.1} parent=1 // pred_fallthru
      _
    // Predicated region
    $region6: #{fcn_forward.1} parent=1 // pred_check
      _
    $region7: #{fcn_forward.1} parent=1 // pred_check_branch
      %14 = sbr.rel (0) target = $region9
    $region8: #{fcn_forward.1} parent=1 // pred_region
      _
    $region9: #{fcn_forward.1} parent=1 // pred_fallthru
      _
    // Predicated region
    $region10: #{fcn_forward.1} parent=1 // pred_check
      _
    $region11: #{fcn_forward.1} parent=1 // pred_check_branch
      %16 = sbr.rel (0) target = $region13
    $region12: #{fcn_forward.1} parent=1 // pred_region
      _
    $region13: #{fcn_forward.1} parent=1 // pred_fallthru
      _
    // Predicated region
    $region14: #{fcn_forward.1} parent=1 // pred_check
      _
    $region15: #{fcn_forward.1} parent=1 // pred_check_branch
      %18 = sbr.rel (0) target = $region17
    $region16: #{fcn_forward.1} parent=1 // pred_region
      _
    $region17: #{fcn_forward.1} parent=1 // pred_fallthru
      _
    // Predicated region
    $region18: #{fcn_forward.1} parent=1 // pred_check
      _
    $region19: #{fcn_forward.1} parent=1 // pred_check_branch
      %20 = sbr.rel (0) target = $region21
    $region20: #{fcn_forward.1} parent=1 // pred_region
      _
    $region21: #{fcn_forward.1} parent=1 // pred_fallthru
      _
    %v21 = vld [vmem:[%s0] sm:$0xff]
    %v22 = vld [vmem:[%s1] sm:$0xff]
    %v23 = vld [vmem:[%s1 + $0x8] sm:$0xff]
    %v24 = vld [vmem:[%s2] sm:$0x1]
    %v26 = vperm.slane %v24, 0
    %vm28 = vcmask 130048
    %v30 = vsel %vm28, %v21, 0
    %32 = vmatpush.msra.mxu0 0.0
    %33 = vmatpush.msra.mxu0 0.0
    %34 = vmatpush.msra.mxu0 0.0
    %35 = vmatpush.msra.mxu0 0.0
    %36 = vmatpush.msra.mxu0 0.0
    %37 = vmatpush.msra.mxu0 0.0
    %38 = vmatpush.msra.mxu0 0.0
    %39 = vmatpush.msra.mxu0 0.0
    %40 = vmatpush.msra.mxu0 0.0
    %41 = vmatpush.msra.mxu0 0.0
    %42 = vmatpush.msra.mxu0 0.0
    %43 = vmatpush.msra.mxu0 0.0
    %44 = vmatpush.msra.mxu0 0.0
    %45 = vmatpush.msra.mxu0 0.0
    %46 = vmatpush.msra.mxu0 %v23
    %47 = vmatpush.msra.mxu0 %v22
    %48 = vmatmul.f32.gmra.mxu0 %v30
    %v49 = vpop.f32.mrf.mxu0
    %v50 = vadd.f32 %v26, %v49
    %51 = vdwg.mxu0
    %v52 = vmul.f32 %v50, 0.5
    %v53 = vtanh.pop %v52
    %v54 = vadd.f32 %v53, 1.0
    %v55 = vmul.f32 %v54, 0.5
    %v56 = vld [vmem:[%s3] sm:$0xff]
    %v57 = vld [vmem:[%s3 + $0x8] sm:$0xff]
    %v58 = vld [vmem:[%s3 + $0x10] sm:$0xff]
    %v59 = vld [vmem:[%s3 + $0x18] sm:$0xff]
    %v60 = vld [vmem:[%s3 + $0x20] sm:$0xff]
    %v61 = vld [vmem:[%s3 + $0x28] sm:$0xff]
    %v62 = vld [vmem:[%s3 + $0x30] sm:$0xff]
    %v63 = vld [vmem:[%s3 + $0x38] sm:$0xff]
    %v64 = vld [vmem:[%s3 + $0x40] sm:$0xff]
    %v65 = vld [vmem:[%s3 + $0x48] sm:$0xff]
    %v66 = vld [vmem:[%s3 + $0x50] sm:$0xff]
    %v67 = vld [vmem:[%s3 + $0x58] sm:$0xff]
    %v68 = vld [vmem:[%s3 + $0x60] sm:$0xff]
    %v69 = vld [vmem:[%s3 + $0x68] sm:$0xff]
    %v70 = vld [vmem:[%s3 + $0x70] sm:$0xff]
    %v71 = vld [vmem:[%s3 + $0x78] sm:$0xff]
    %v72 = vld [vmem:[%s4] sm:$0x1]
    %v74 = vperm.slane %v72, 0
    %76 = vmatpush.msra.mxu0 %v71
    %77 = vmatpush.msra.mxu0 %v70
    %78 = vmatpush.msra.mxu0 %v69
    %79 = vmatpush.msra.mxu0 %v68
    %80 = vmatpush.msra.mxu0 %v67
    %81 = vmatpush.msra.mxu0 %v66
    %82 = vmatpush.msra.mxu0 %v65
    %83 = vmatpush.msra.mxu0 %v64
    %84 = vmatpush.msra.mxu0 %v63
    %85 = vmatpush.msra.mxu0 %v62
    %86 = vmatpush.msra.mxu0 %v61
    %87 = vmatpush.msra.mxu0 %v60
    %88 = vmatpush.msra.mxu0 %v59
    %89 = vmatpush.msra.mxu0 %v58
    %90 = vmatpush.msra.mxu0 %v57
    %91 = vmatpush.msra.mxu0 %v56
    %92 = vmatmul.f32.gmra.mxu0 %v55
    %v93 = vpop.f32.mrf.mxu0
    %v94 = vadd.f32 %v74, %v93
    %95 = vdwg.mxu0
    %vm96 = vcmask 64512
    %v97 = vsel %vm96, %v94, -inf
    %98 = vmax.xlane.f32.xlu0 %v97
    %v99 = vpop.xlane.xlu0 %98
    %v100 = vsub.f32 %v94, %v99
    %v101 = vmul.f32 %v100, 1.442695
    %v102 = vpow.pop %v101
    %v103 = vsel %vm96, %v102, 0.0
    %104 = vadd.xlane.f32.xlu0 %v103
    %v105 = vpop.xlane.xlu0 %104
    %v106 = vrcp.pop %v105
    %v107 = vmul.f32 %v105, %v106
    %v108 = vsub.f32 1.0, %v107
    %v109 = vmul.f32 %v106, %v108
    %v110 = vadd.f32 %v106, %v109
    %vm111 = vweird.f32 %v105
    %vm112 = vweird.f32 %v106
    %vm113 = vmor %vm111, %vm112
    %v114 = vsel %vm113, %v106, %v110
    %v115 = vand.u32 2147483647, %v105
    %vm116 = vcmp.eq.f32.partialorder %v115, 8.507059e+37
    %v117 = vand.u32 %v105, 2147483648
    %v118 = vor.u32 1.1754944e-38, %v117
    %v119 = vsel %vm116, %v118, %v114
    %v120 = vmul.f32 %v102, %v119
    %121 = vst.msk [vmem:[#allocation2] sm:$0xff] %vm96, %v120
    // Predicated region
    $region22: #{fcn_forward.1} parent=1 // pred_check
      _
    $region23: #{fcn_forward.1} parent=1 // pred_check_branch
      %123 = sbr.rel (0) target = $region25
    $region24: #{fcn_forward.1} parent=1 // pred_region
      %125 = vsyncadd [#allocation3], 0
      %s127 = sshll.u32 [#allocation2], 4
      %s128 = int_to_ptr.vmem [resolvable:$true] %s127
      %s129 = sshll.u32 %s5, 4
      %s130 = int_to_ptr.hbm [resolvable:$true] %s129
      %132 = dma.vmem_to_hbm [thread:$0]  %s128, 128, %s130, [#allocation3]
    $region25: #{fcn_forward.1} parent=1 // pred_fallthru
      _
    // Predicated region
    $region26: #{fcn_forward.1} parent=1 // pred_check
      _
    $region27: #{fcn_forward.1} parent=1 // pred_check_branch
      %134 = sbr.rel (0) target = $region29
    $region28: #{fcn_forward.1} parent=1 // pred_region
      %136 = dma.done [#allocation3], 128
    $region29: #{fcn_forward.1} parent=1 // pred_fallthru
      _
    %137 = vsyncpa [#allocation3], 1

</llo_original>
